<compile_context>
chip_gen: v7x
topology: tpu7x:2x2x1
jax: 0.10.0
libtpu: 0.0.40
codegen_flags: <defaults>
</compile_context>

<pallas_src>
import functools

import jax
import jax.numpy as jnp
from jax.experimental import pallas as pl
from jax.experimental.pallas import tpu as pltpu


def _round_up(n: int, m: int) -> int:
    return ((n + m - 1) // m) * m


@functools.lru_cache(maxsize=1)
def _vmem_limit_bytes() -> int:
    """Generation-aware scoped-VMEM budget (~3/4 of physical capacity)."""
    try:
        cap = pltpu.get_tpu_info().vmem_capacity_bytes
        return int((cap * 3) // 4)          # 96 MiB on v5e/v6e, 48 MiB on v7x
    except Exception:
        return 48 << 20                     # safe on every generation


def _pick_row_tile(rows: int, tile_rows: int) -> int:
    tm = _round_up(min(tile_rows, _round_up(rows, 8)), 8)
    # v7x megacore: ensure >= 2 "parallel" grid steps so both TensorCores get
    # work; halve the tile instead of running a 1-step grid.
    if pl.cdiv(rows, tm) < 2 and rows > 8:
        tm = _round_up(pl.cdiv(rows, 2), 8)
    return tm


def _pick_nk_tile(D: int) -> int:
    for t in (512, 256, 128):
        if D % t == 0:
            return t
    return D  # non-128-multiple D: full-extent block is always legal


# ---------------------------------------------------------------------------
# Path A: weight fits comfortably in VMEM -> keep it resident (single buffer),
# stream row tiles of x over a 1-D fully "parallel" grid.
# ---------------------------------------------------------------------------
def _residual_linear_kernel(x_ref, w_ref, b_ref, o_ref):
    # x_ref: (tm, D)  activation row tile (input dtype)
    # w_ref: (D, D)   resident weight (bf16 -> MXU fast path)
    # b_ref: (1, D)   bias row (f32)
    x = x_ref[...]
    y = jnp.dot(x.astype(w_ref.dtype), w_ref[...],
                preferred_element_type=jnp.float32)
    # bias + residual ride in VALU slots under the MXU / DMA, all in f32;
    # the skip connection uses the un-cast x so it loses no precision.
    y = y + b_ref[...]
    o_ref[...] = (y + x.astype(jnp.float32)).astype(o_ref.dtype)


# ---------------------------------------------------------------------------
# Path B: weight too large to keep resident (e.g. ViT MLP widths on v7x with
# 64 MiB VMEM) -> tile over N and K with an f32 accumulator scratch;
# reduction axis K is last and "arbitrary".
# ---------------------------------------------------------------------------
def _residual_linear_tiled_kernel(x_lhs_ref, w_ref, b_ref, x_res_ref, o_ref,
                                  acc_ref):
    k = pl.program_id(2)

    @pl.when(k == 0)
    def _():
        acc_ref[...] = jnp.zeros_like(acc_ref)

    acc_ref[...] += jnp.dot(x_lhs_ref[...].astype(w_ref.dtype), w_ref[...],
                            preferred_element_type=jnp.float32)

    @pl.when(k == pl.num_programs(2) - 1)
    def _():
        o_ref[...] = (acc_ref[...] + b_ref[...]
                      + x_res_ref[...].astype(jnp.float32)).astype(o_ref.dtype)


@functools.partial(
    jax.jit,
    static_argnames=("tile_rows", "mxu_dtype", "weight_resident_bytes"))
def residual_linear(x, w, b, *, tile_rows: int = 512,
                    mxu_dtype=jnp.bfloat16,
                    weight_resident_bytes: int = 8 << 20):
    """Residual(Linear)(x) = x @ w + b + x, fused in a single pallas_call.

    x: (B, S, D)   w: (D, D)   b: (D,)

    Output dtype follows x.dtype — feed bf16 activations at the model level to
    halve the HBM-bound x/out streams (no wrapper-side cast is added here).
    Store w in bf16 / b in f32 at parameter-load time so the casts below are
    no-ops on the hot path.
    """
    B, S, D = x.shape
    rows = B * S

    x2 = x.reshape(rows, D)                           # bitcast, no HBM pass
    w_p = w if (mxu_dtype is None or w.dtype == mxu_dtype) else w.astype(mxu_dtype)
    b2 = b.reshape(1, D)
    if b2.dtype != jnp.float32:
        b2 = b2.astype(jnp.float32)

    tm = _pick_row_tile(rows, tile_rows)
    grid_rows = pl.cdiv(rows, tm)       # no row padding: Pallas masks the
                                        # trailing partial block on store.
    vmem_limit = _vmem_limit_bytes()
    w_bytes = D * D * w_p.dtype.itemsize

    if w_bytes <= weight_resident_bytes:
        # ------- Path A: resident weight, 1-D row grid ---------------------
        out = pl.pallas_call(
            _residual_linear_kernel,
            out_shape=jax.ShapeDtypeStruct((rows, D), x.dtype),
            grid_spec=pltpu.PrefetchScalarGridSpec(
                num_scalar_prefetch=0,
                grid=(grid_rows,),
                in_specs=[
                    # Row tile of x: pipelined (double-buffered by default).
                    pl.BlockSpec((tm, D), lambda i: (i, 0)),
                    # Weight constant across grid steps -> single buffer.
                    pl.BlockSpec((D, D), lambda i: (0, 0),
                                 pipeline_mode=pl.Buffered(1)),
                    # Bias row, also constant -> single buffer.
                    pl.BlockSpec((1, D), lambda i: (0, 0),
                                 pipeline_mode=pl.Buffered(1)),
                ],
                out_specs=pl.BlockSpec((tm, D), lambda i: (i, 0)),
            ),
            compiler_params=pltpu.CompilerParams(
                dimension_semantics=("parallel",),
                vmem_limit_bytes=vmem_limit,
            ),
        )(x2, w_p, b2)
    else:
        # ------- Path B: tiled weight + f32 accumulator (large D / v7x) ----
        t = _pick_nk_tile(D)
        nk = D // t
        out = pl.pallas_call(
            _residual_linear_tiled_kernel,
            out_shape=jax.ShapeDtypeStruct((rows, D), x.dtype),
            grid_spec=pltpu.PrefetchScalarGridSpec(
                num_scalar_prefetch=0,
                grid=(grid_rows, nk, nk),            # (rows, N, K) — K last
                in_specs=[
                    pl.BlockSpec((tm, t), lambda i, n, k: (i, k)),  # x (LHS)
                    pl.BlockSpec((t, t), lambda i, n, k: (k, n)),   # weight
                    pl.BlockSpec((1, t), lambda i, n, k: (0, n)),   # bias
                    pl.BlockSpec((tm, t), lambda i, n, k: (i, n)),  # x (skip)
                ],
                out_specs=pl.BlockSpec((tm, t), lambda i, n, k: (i, n)),
                scratch_shapes=[pltpu.VMEM((tm, t), jnp.float32)],
            ),
            compiler_params=pltpu.CompilerParams(
                dimension_semantics=("parallel", "parallel", "arbitrary"),
                vmem_limit_bytes=vmem_limit,
            ),
        )(x2, w_p, b2, x2)

    return out.reshape(B, S, D)


if __name__ == "__main__":
    key = jax.random.PRNGKey(0)
    kx, kw, kb, kx2 = jax.random.split(key, 4)

    # Small shapes consistent with the ViT Residual block: batch=2, seq=8, dim=32.
    B, S, D = 2, 8, 32
    x = jax.random.normal(kx, (B, S, D), dtype=jnp.float32)
    w = jax.random.normal(kw, (D, D), dtype=jnp.float32) * 0.02
    b = jax.random.normal(kb, (D,), dtype=jnp.float32) * 0.02

    # Pre-cast parameters ONCE (hoisted out of the hot path).
    w_bf16 = w.astype(jnp.bfloat16)
    b_f32 = b.astype(jnp.float32)

    def ref(x_, w_, b_):
        # fn(x) + x with the same bf16-input / f32-accumulate matmul.
        r, d = x_.shape[0] * x_.shape[1], x_.shape[2]
        x2_ = x_.reshape(r, d)
        xw = jax.lax.dot_general(
            x2_.astype(jnp.bfloat16), w_.astype(jnp.bfloat16),
            dimension_numbers=(((1,), (0,)), ((), ())),
            preferred_element_type=jnp.float32)
        return (xw + b_[None, :] + x2_).reshape(x_.shape)

    # 1) Resident-weight path (typical case).
    out = jax.block_until_ready(residual_linear(x, w_bf16, b_f32))
    assert out.shape == x.shape and out.dtype == x.dtype
    assert jnp.allclose(out, ref(x, w, b), atol=1e-3, rtol=1e-3)

    # 2) Trailing partial row block (rows = 15 is not a multiple of the tile).
    x_odd = jax.random.normal(kx2, (3, 5, D), dtype=jnp.float32)
    out_odd = jax.block_until_ready(residual_linear(x_odd, w_bf16, b_f32))
    assert jnp.allclose(out_odd, ref(x_odd, w, b), atol=1e-3, rtol=1e-3)

    # 3) Force the tiled (N, K) path used when the weight is too large to
    #    keep resident in VMEM (e.g. ViT MLP widths on v7x).
    out_tiled = jax.block_until_ready(
        residual_linear(x, w_bf16, b_f32, weight_resident_bytes=0))
    assert jnp.allclose(out_tiled, ref(x, w, b), atol=1e-3, rtol=1e-3)

    # Loose check against a full-f32 reference (bf16 MXU inputs lose mantissa).
    ref_f32 = jnp.einsum("bsd,de->bse", x, w) + b + x
    assert jnp.allclose(out, ref_f32, atol=5e-2, rtol=5e-2)

    print("KERNEL_OK")
</pallas_src>

<mosaic_0001>
module attributes {stable_mosaic.version = 11 : i64} {
  func.func @_residual_linear_kernel(%arg0: i32, %arg1: memref<8x32xf32, #tpu.memory_space<vmem>>, %arg2: memref<32x32xbf16, #tpu.memory_space<vmem>>, %arg3: memref<1x32xf32, #tpu.memory_space<vmem>>, %arg4: memref<8x32xf32, #tpu.memory_space<vmem>>) attributes {dimension_semantics = [#tpu.dimension_semantics<parallel>], iteration_bounds = array<i64: 2>, scalar_prefetch = 0 : i64, scratch_operands = 0 : i64, tpu.core_type = #tpu.core_type<tc>, window_params = [{transform_indices = @transform_0, window_bounds = array<i64: 8, 32>}, {pipeline_mode = #tpu.pipeline_mode<synchronous>, transform_indices = @transform_1, window_bounds = array<i64: 32, 32>}, {pipeline_mode = #tpu.pipeline_mode<synchronous>, transform_indices = @transform_2, window_bounds = array<i64: 1, 32>}, {transform_indices = @transform_3, window_bounds = array<i64: 8, 32>}]} {
    %c0 = arith.constant 0 : index
    %c0_0 = arith.constant 0 : index
    %0 = vector.load %arg1[%c0, %c0_0] : memref<8x32xf32, #tpu.memory_space<vmem>>, vector<8x32xf32>
    %1 = arith.truncf %0 : vector<8x32xf32> to vector<8x32xbf16>
    %c0_1 = arith.constant 0 : index
    %c0_2 = arith.constant 0 : index
    %2 = vector.load %arg2[%c0_1, %c0_2] : memref<32x32xbf16, #tpu.memory_space<vmem>>, vector<32x32xbf16>
    %cst = arith.constant dense<0.000000e+00> : vector<8x32xf32>
    %3 = tpu.matmul %1, %2, %cst {dimension_numbers = #tpu.dot_dimension_numbers<[1], [0], [0], [1], [0, 0, 1, 1], [], []>} : vector<8x32xbf16>, vector<32x32xbf16>, vector<8x32xf32> -> vector<8x32xf32>
    %c0_3 = arith.constant 0 : index
    %c0_4 = arith.constant 0 : index
    %4 = vector.load %arg3[%c0_3, %c0_4] : memref<1x32xf32, #tpu.memory_space<vmem>>, vector<1x32xf32>
    %5 = vector.broadcast %4 : vector<1x32xf32> to vector<8x32xf32>
    %6 = arith.addf %3, %5 : vector<8x32xf32>
    %7 = arith.addf %6, %0 : vector<8x32xf32>
    %c0_5 = arith.constant 0 : index
    %c0_6 = arith.constant 0 : index
    %8 = vector.load %arg4[%c0_5, %c0_6] : memref<8x32xf32, #tpu.memory_space<vmem>>, vector<8x32xf32>
    tpu.vector_store %arg4[%c0_5, %c0_6], %7 {strides = array<i32>} : memref<8x32xf32, #tpu.memory_space<vmem>>, vector<8x32xf32>,
    return
  }
  func.func @transform_0(%arg0: i32) -> (i32, i32) {
    %c0_i32 = arith.constant 0 : i32
    %c0_i32_0 = arith.constant 0 : i32
    return %arg0, %c0_i32 : i32, i32
  }
  func.func @transform_1(%arg0: i32) -> (i32, i32) {
    %c0_i32 = arith.constant 0 : i32
    %c0_i32_0 = arith.constant 0 : i32
    %c0_i32_1 = arith.constant 0 : i32
    return %c0_i32, %c0_i32_0 : i32, i32
  }
  func.func @transform_2(%arg0: i32) -> (i32, i32) {
    %c0_i32 = arith.constant 0 : i32
    %c0_i32_0 = arith.constant 0 : i32
    %c0_i32_1 = arith.constant 0 : i32
    return %c0_i32, %c0_i32_0 : i32, i32
  }
  func.func @transform_3(%arg0: i32) -> (i32, i32) {
    %c0_i32 = arith.constant 0 : i32
    %c0_i32_0 = arith.constant 0 : i32
    return %arg0, %c0_i32 : i32, i32
  }
}

</mosaic_0001>

<llo_original>
// kernel: residual_linear.1
$region0: #{residual_linear.1}
  #allocation0 [shape = 'u32[]', space=smem, size = 0x4, offset = 0x4, fixed_abs, tag = 'smem constant byte address 0x4 - core index']
  #allocation1 [shape = 'u32[144,128]{1,0:T(1,128)}', space=vmem, size = 0x12000, scoped, tag = 'internal scratch']
  %s0 = inlined_call_operand.hbm [shape: f32[16,32], index: 0, kind: input, shape index: {}]
  %s1 = inlined_call_operand.hbm [shape: bf16[32,32], index: 1, kind: input, shape index: {}]
  %s2 = inlined_call_operand.vmem [shape: f32[1,32], index: 2, kind: input, shape index: {}]
  %s3 = inlined_call_operand.hbm [shape: f32[16,32], index: 3, kind: output, shape index: {}]
  %s4 = sld [smem:[#allocation0]]
  $region53: #{residual_linear.1} parent=0
    _
  %s6 = ssub.s32 1, %s4
  %s7 = scalar_select 0, %s6, %s4
  $region1: #{residual_linear.1} parent=0
    #allocation2 [shape = 'u8[8192]{0}', space=vmem, size = 0x2000, scoped, tag = 'input window, operand 0']
    #allocation3 [shape = 's32[2]{0}', space=sflag, size = 0x8, scoped, tag = 'scoped memory for residual_linear.1']
    #allocation4 [shape = 's32[2]{0}', space=sflag, size = 0x8, scoped, tag = 'scoped memory for residual_linear.1']
    #allocation5 [shape = 'u8[8192]{0}', space=vmem, size = 0x2000, scoped, tag = 'input window, operand 1, single buffered']
    #allocation6 [shape = 's32[1]{0}', space=sflag, size = 0x4, scoped, tag = 'scoped memory for residual_linear.1']
    #allocation7 [shape = 'u8[8192]{0}', space=vmem, size = 0x2000, scoped, tag = 'output window, operand 0']
    %8 = vsyncpa [#allocation3], 0
    %s9 = scalar_lea.sflag [#allocation3], 1
    %10 = vsyncpa %s9, 0
    %11 = vsyncpa [#allocation6], 0
    %12 = vsyncpa [#allocation4], 0
    %s13 = scalar_lea.sflag [#allocation4], 1
    %14 = vsyncpa %s13, 0
    loop: start=0, step=1, limit=4
    $region2: #{residual_linear.1} parent=1 // loop_pre_header
      _
    $region3: #{residual_linear.1} parent=1 // loop_header
      %s16 = sphi 0, %s20
      %p17 = scmp.ge.s32.totalorder %s16, 4
      %s26 = sphi 0, %s28
      %s29 = sphi 0, %s26
      %s30 = sphi 0, %s29
      %s46 = sphi 0, %s30
      %s50 = sphi 0, %s50
      %s52 = sphi 0, %s50
      %s53 = sphi 0, %s52
      %s67 = sphi 0, %s53
      %s71 = sphi 0, %s71
      %s73 = sphi 0, %s71
      %s74 = sphi 0, %s73
      %s88 = sphi 0, %s74
      %s94 = sphi 0, %s96
      %s97 = sphi 0, %s94
      %s98 = sphi 0, %s97
      %s114 = sphi 0, %s98
    $region4: #{residual_linear.1} parent=1 // loop_header_branch
      %19 = sbr.rel (%p17) target = $region8
    $region5: #{residual_linear.1} parent=1 // loop_body
      %s21 = ssub.s32 %s16, 1
      %s22 = ssub.s32 %s16, 2
      %s23 = sadd.s32 %s16, 1
      %s24 = ssub.s32 %s16, %s23
      %p25 = scmp.eq.s32.totalorder %s24, 0
      %s27 = sadd.s32 %s26, 1
      %s28 = scalar_select %p25, %s26, %s27
      %p31 = pneg %p25
      %p32 = scmp.eq.s32.totalorder %s16, 1
      %p33 = por %p31, %p32
      %p34 = scmp.ne.s32.totalorder %s26, %s29
      %p35 = scmp.eq.s32.totalorder %s16, 0
      %p36 = por %p34, %p35
      %p37 = scmp.ne.s32.totalorder %s26, %s29
      %p38 = scmp.eq.s32.totalorder %s21, 1
      %p39 = por %p37, %p38
      %p40 = scmp.ne.s32.totalorder %s29, %s30
      %p41 = scmp.eq.s32.totalorder %s21, 0
      %p42 = por %p40, %p41
      %p43 = scmp.ne.s32.totalorder %s29, %s30
      %p44 = scmp.eq.s32.totalorder %s22, 1
      %p45 = por %p43, %p44
      %p47 = scmp.ne.s32.totalorder %s30, %s46
      %p48 = scmp.eq.s32.totalorder %s22, 0
      %p49 = por %p47, %p48
      %s51 = sadd.s32 %s50, 1
      %p54 = scmp.eq.s32.totalorder %s16, 1
      %p55 = scmp.ne.s32.totalorder %s50, %s52
      %p56 = scmp.eq.s32.totalorder %s16, 0
      %p57 = por %p55, %p56
      %p58 = scmp.ne.s32.totalorder %s50, %s52
      %p59 = scmp.eq.s32.totalorder %s21, 1
      %p60 = por %p58, %p59
      %p61 = scmp.ne.s32.totalorder %s52, %s53
      %p62 = scmp.eq.s32.totalorder %s21, 0
      %p63 = por %p61, %p62
      %p64 = scmp.ne.s32.totalorder %s52, %s53
      %p65 = scmp.eq.s32.totalorder %s22, 1
      %p66 = por %p64, %p65
      %p68 = scmp.ne.s32.totalorder %s53, %s67
      %p69 = scmp.eq.s32.totalorder %s22, 0
      %p70 = por %p68, %p69
      %s72 = sadd.s32 %s71, 1
      %p75 = scmp.eq.s32.totalorder %s16, 1
      %p76 = scmp.ne.s32.totalorder %s71, %s73
      %p77 = scmp.eq.s32.totalorder %s16, 0
      %p78 = por %p76, %p77
      %p79 = scmp.ne.s32.totalorder %s71, %s73
      %p80 = scmp.eq.s32.totalorder %s21, 1
      %p81 = por %p79, %p80
      %p82 = scmp.ne.s32.totalorder %s73, %s74
      %p83 = scmp.eq.s32.totalorder %s21, 0
      %p84 = por %p82, %p83
      %p85 = scmp.ne.s32.totalorder %s73, %s74
      %p86 = scmp.eq.s32.totalorder %s22, 1
      %p87 = por %p85, %p86
      %p89 = scmp.ne.s32.totalorder %s74, %s88
      %p90 = scmp.eq.s32.totalorder %s22, 0
      %p91 = por %p89, %p90
      %s92 = ssub.s32 %s16, %s23
      %p93 = scmp.eq.s32.totalorder %s92, 0
      %s95 = sadd.s32 %s94, 1
      %s96 = scalar_select %p93, %s94, %s95
      %p99 = pneg %p93
      %p100 = scmp.eq.s32.totalorder %s16, 1
      %p101 = por %p99, %p100
      %p102 = scmp.ne.s32.totalorder %s94, %s97
      %p103 = scmp.eq.s32.totalorder %s16, 0
      %p104 = por %p102, %p103
      %p105 = scmp.ne.s32.totalorder %s94, %s97
      %p106 = scmp.eq.s32.totalorder %s21, 1
      %p107 = por %p105, %p106
      %p108 = scmp.ne.s32.totalorder %s97, %s98
      %p109 = scmp.eq.s32.totalorder %s21, 0
      %p110 = por %p108, %p109
      %p111 = scmp.ne.s32.totalorder %s97, %s98
      %p112 = scmp.eq.s32.totalorder %s22, 1
      %p113 = por %p111, %p112
      %p115 = scmp.ne.s32.totalorder %s98, %s114
      %p116 = scmp.eq.s32.totalorder %s22, 0
      %p117 = por %p115, %p116
      %p118 = scmp.le.s32.totalorder 1, %s16
      %p119 = scmp.lt.s32.totalorder %s16, 3
      %p120 = pnand %p118, %p119
      %p121 = pneg %p120
      // Predicated region
      $region9: #{residual_linear.1} parent=5 // pred_check
        _
      $region10: #{residual_linear.1} parent=5 // pred_check_branch
        %123 = sbr.rel (%p120) target = $region12
      $region11: #{residual_linear.1} parent=5 // pred_region
        %s124 = ssub.s32 %s16, 1
        // Predicated region
        $region13: #{residual_linear.1} parent=11 // pred_check
          %p125 = pneg %p63
        $region14: #{residual_linear.1} parent=11 // pred_check_branch
          %127 = sbr.rel (%p125) target = $region16
        $region15: #{residual_linear.1} parent=11 // pred_region
          %s129 = ssub.s32 256, 256
          %130 = vsyncadd [#allocation6], %s129
          %s131 = sshll.u32 [#allocation5], 4
          %s132 = int_to_ptr.vmem [resolvable:$true] %s131
          %137 = dma.hbm_to_vmem [thread:$0]  %s1, 256, %s132, [#allocation6], 64, 64, 4
        $region16: #{residual_linear.1} parent=11 // pred_fallthru
          _
        // Predicated region
        $region17: #{residual_linear.1} parent=11 // pred_check
          %p138 = pneg %p84
        $region18: #{residual_linear.1} parent=11 // pred_check_branch
          %140 = sbr.rel (%p138) target = $region20
        $region19: #{residual_linear.1} parent=11 // pred_region
          _
        $region20: #{residual_linear.1} parent=11 // pred_fallthru
          _
      $region12: #{residual_linear.1} parent=5 // pred_fallthru
        _
      %p141 = scmp.lt.s32.totalorder %s16, 2
      // Predicated region
      $region21: #{residual_linear.1} parent=5 // pred_check
        %p142 = pneg %p141
      $region22: #{residual_linear.1} parent=5 // pred_check_branch
        %144 = sbr.rel (%p142) target = $region24
      $region23: #{residual_linear.1} parent=5 // pred_region
        // Predicated region
        $region25: #{residual_linear.1} parent=23 // pred_check
          %p145 = pneg %p36
        $region26: #{residual_linear.1} parent=23 // pred_check_branch
          %147 = sbr.rel (%p145) target = $region28
        $region27: #{residual_linear.1} parent=23 // pred_region
          %s148 = sand.u32 %s26, 1
          %s149 = scalar_lea.sflag [#allocation3], %s148
          %s150 = sand.u32 %s26, 1
          %s151 = smul.addr %s150, 8
          %s152 = scalar_lea.vmem [#allocation2], %s151
          %s154 = ssub.s32 128, 128
          %155 = vsyncadd %s149, %s154
          %s156 = smul.addr %s16, 128
          %s157 = scalar_lea.hbm %s0, %s156
          %s159 = sshll.u32 %s152, 4
          %s160 = int_to_ptr.vmem [resolvable:$true] %s159
          %162 = dma.hbm_to_vmem [thread:$0]  %s157, 128, %s160, %s149
        $region28: #{residual_linear.1} parent=23 // pred_fallthru
          _
      $region24: #{residual_linear.1} parent=5 // pred_fallthru
        _
      %p163 = scmp.le.s32.totalorder 1, %s16
      %p164 = scmp.lt.s32.totalorder %s16, 3
      %p165 = pnand %p163, %p164
      %p166 = pneg %p165
      // Predicated region
      $region29: #{residual_linear.1} parent=5 // pred_check
        _
      $region30: #{residual_linear.1} parent=5 // pred_check_branch
        %168 = sbr.rel (%p165) target = $region32
      $region31: #{residual_linear.1} parent=5 // pred_region
        %s169 = ssub.s32 %s16, 1
        %s170 = sand.u32 %s29, 1
        %s171 = scalar_lea.sflag [#allocation3], %s170
        %s172 = sand.u32 %s29, 1
        %s173 = smul.addr %s172, 8
        %s174 = scalar_lea.vmem [#allocation2], %s173
        // Predicated region
        $region33: #{residual_linear.1} parent=31 // pred_check
          %p175 = pneg %p42
        $region34: #{residual_linear.1} parent=31 // pred_check_branch
          %177 = sbr.rel (%p175) target = $region36
        $region35: #{residual_linear.1} parent=31 // pred_region
          %178 = dma.done %s171, 128
        $region36: #{residual_linear.1} parent=31 // pred_fallthru
          _
        // Predicated region
        $region37: #{residual_linear.1} parent=31 // pred_check
          %p179 = pneg %p63
        $region38: #{residual_linear.1} parent=31 // pred_check_branch
          %181 = sbr.rel (%p179) target = $region40
        $region39: #{residual_linear.1} parent=31 // pred_region
          %182 = dma.done [#allocation6], 256
        $region40: #{residual_linear.1} parent=31 // pred_fallthru
          _
        %s183 = sand.u32 %s29, 1
        %s184 = scalar_lea.sflag [#allocation3], %s183
        %s185 = sand.u32 %s29, 1
        %s186 = smul.addr %s185, 8
        %s187 = scalar_lea.vmem [#allocation2], %s186
        %p188 = pneg %p42
        %p189 = pneg %p39
        %p190 = pneg %p63
        %p191 = pneg %p60
        %p192 = pneg %p84
        %p193 = pneg %p81
        %p194 = pneg %p110
        %p195 = pneg %p107
        %s196 = sand.u32 %s97, 1
        %s197 = scalar_lea.sflag [#allocation4], %s196
        %s198 = sand.u32 %s97, 1
        %s199 = smul.addr %s198, 8
        %s200 = scalar_lea.vmem [#allocation7], %s199
        %v202 = vld [vmem:[%s174] sm:$0xff]
        %v203 = vpack.c.bf16 %v202, %v202
        %v204 = vld [vmem:[#allocation5] sm:$0xf]
        %v205 = vld [vmem:[#allocation5 + $0x4] sm:$0xf]
        %v206 = vld [vmem:[#allocation5 + $0x8] sm:$0xf]
        %v207 = vld [vmem:[#allocation5 + $0xc] sm:$0xf]
        %v208 = vld [vmem:[%s2] sm:$0x1]
        %v210 = vlaneseq
        %v211 = vshrl.u32 %v210, 7
        %v212 = vsub.s32 0, %v211
        %v213 = vrot.slane %v208, %v212
        %v219 = vunpack.c.l.b16 %v204
        %v220 = vunpack.c.l.b16 %v205
        %v221 = vunpack.c.l.b16 %v206
        %v222 = vunpack.c.l.b16 %v207
        %v223 = vpack.c.b16 %v220, %v219
        %v224 = vpack.c.b16 %v222, %v221
        %vm227 = vcmask 261120
        %v229 = vsel %vm227, %v203, 0
        %231 = vmatprep.subr.bf16.mxu0 0
        %232 = vmatpush1.bf16.msra.mxu0 %v223
        %233 = vmatprep.subr.bf16.mxu0 0
        %234 = vmatpush1.bf16.msra.mxu0 %v224
        %235 = vmatprep.subr.bf16.mxu0 0
        %236 = vmatpush1.bf16.msra.mxu0 0
        %237 = vmatprep.subr.bf16.mxu0 0
        %238 = vmatpush1.bf16.msra.mxu0 0
        %239 = vmatprep.subr.bf16.mxu0 0
        %240 = vmatpush1.bf16.msra.mxu0 0
        %241 = vmatprep.subr.bf16.mxu0 0
        %242 = vmatpush1.bf16.msra.mxu0 0
        %243 = vmatprep.subr.bf16.mxu0 0
        %244 = vmatpush1.bf16.msra.mxu0 0
        %245 = vmatprep.subr.bf16.mxu0 0
        %246 = vmatpush1.bf16.msra.mxu0 0
        %247 = vmatprep.subr.bf16.mxu0 0
        %248 = vmatpush1.bf16.msra.mxu0 0
        %249 = vmatprep.subr.bf16.mxu0 0
        %250 = vmatpush1.bf16.msra.mxu0 0
        %251 = vmatprep.subr.bf16.mxu0 0
        %252 = vmatpush1.bf16.msra.mxu0 0
        %253 = vmatprep.subr.bf16.mxu0 0
        %254 = vmatpush1.bf16.msra.mxu0 0
        %255 = vmatprep.subr.bf16.mxu0 0
        %256 = vmatpush1.bf16.msra.mxu0 0
        %257 = vmatprep.subr.bf16.mxu0 0
        %258 = vmatpush1.bf16.msra.mxu0 0
        %259 = vmatprep.subr.bf16.mxu0 0
        %260 = vmatpush1.bf16.msra.mxu0 0
        %261 = vmatprep.subr.bf16.mxu0 0
        %262 = vmatpush1.bf16.msra.mxu0 0
        %263 = vmatprep.mubr.bf16.mxu0 0
        %264 = vmatmul.mubr.bf16.gmra.mrb[0].mxu0 %v229
        %v265 = vpop.f32.mrb[0].mxu0
        %v266 = vadd.f32 %v213, %v265
        %v267 = vpop.f32.mrb[0].mxu0
        %v268 = vpop.f32.mrb[0].mxu0
        %v269 = vpop.f32.mrb[0].mxu0
        %270 = vdwg.mxu0
        %v271 = vadd.f32 %v266, %v202
        %272 = vst.msk [vmem:[%s200] sm:$0xff] %vm227, %v271
        %s273 = sand.u32 %s97, 1
        %s274 = scalar_lea.sflag [#allocation4], %s273
        %s275 = sand.u32 %s97, 1
        %s276 = smul.addr %s275, 8
        %s277 = scalar_lea.vmem [#allocation7], %s276
        // Predicated region
        $region41: #{residual_linear.1} parent=31 // pred_check
          %p278 = pneg %p107
        $region42: #{residual_linear.1} parent=31 // pred_check_branch
          %280 = sbr.rel (%p278) target = $region44
        $region43: #{residual_linear.1} parent=31 // pred_region
          %s282 = ssub.s32 128, 128
          %283 = vsyncadd %s274, %s282
          %s284 = smul.addr %s21, 128
          %s285 = scalar_lea.hbm %s3, %s284
          %s287 = sshll.u32 %s277, 4
          %s288 = int_to_ptr.vmem [resolvable:$true] %s287
          %290 = dma.vmem_to_hbm [thread:$0]  %s288, 128, %s285, %s274
        $region44: #{residual_linear.1} parent=31 // pred_fallthru
          _
      $region32: #{residual_linear.1} parent=5 // pred_fallthru
        _
      %p291 = scmp.le.s32.totalorder 2, %s16
      // Predicated region
      $region45: #{residual_linear.1} parent=5 // pred_check
        %p292 = pneg %p291
      $region46: #{residual_linear.1} parent=5 // pred_check_branch
        %294 = sbr.rel (%p292) target = $region48
      $region47: #{residual_linear.1} parent=5 // pred_region
        %s295 = ssub.s32 %s16, 2
        // Predicated region
        $region49: #{residual_linear.1} parent=47 // pred_check
          %p296 = pneg %p113
        $region50: #{residual_linear.1} parent=47 // pred_check_branch
          %298 = sbr.rel (%p296) target = $region52
        $region51: #{residual_linear.1} parent=47 // pred_region
          %s299 = sand.u32 %s98, 1
          %s300 = scalar_lea.sflag [#allocation4], %s299
          %s301 = sand.u32 %s98, 1
          %s302 = smul.addr %s301, 8
          %s303 = scalar_lea.vmem [#allocation7], %s302
          %304 = dma.done %s300, 128
        $region52: #{residual_linear.1} parent=47 // pred_fallthru
          _
      $region48: #{residual_linear.1} parent=5 // pred_fallthru
        _
    $region6: #{residual_linear.1} parent=1 // loop_footer
      %s20 = sadd.s32 1, %s16
    $region7: #{residual_linear.1} parent=1 // loop_footer_branch
      %15 = sbr.rel target = $region3
    $region8: #{residual_linear.1} parent=1 // loop_exit
      _
    %305 = vsyncpa [#allocation3], 1
    %s306 = scalar_lea.sflag [#allocation3], 1
    %307 = vsyncpa %s306, 1
    %308 = vsyncpa [#allocation6], 1
    %309 = vsyncpa [#allocation4], 1
    %s310 = scalar_lea.sflag [#allocation4], 1
    %311 = vsyncpa %s310, 1

</llo_original>
